<compile_context>
chip_gen: v7x
topology: tpu7x:2x2x1
jax: 0.10.0
libtpu: 0.0.40
codegen_flags: <defaults>
</compile_context>

<pallas_src>
import functools

import jax
import jax.numpy as jnp
from jax.experimental import pallas as pl
from jax.experimental.pallas import tpu as pltpu


def _round_up(x, m):
    return (x + m - 1) // m * m


# ------------- Kernel A: avg-pool over H*W + fc1, tiled over the batch axis -----------
def _pool_fc1_kernel(x_ref, w1_ref, h_ref, *, inv_hw):
    # x_ref : (TN, HW, C) bf16  -- C on lanes, HW on sublanes
    # w1_ref: (C, HID)    bf16
    # h_ref : (TN, HID)   f32
    x = x_ref[...].astype(jnp.float32)
    pooled = jnp.sum(x, axis=1) * inv_hw                      # (TN, C) f32, sublane reduce
    h_ref[...] = jnp.dot(pooled.astype(jnp.bfloat16), w1_ref[...],
                         preferred_element_type=jnp.float32)  # bf16 MXU, f32 acc


# ------- Kernel B: (+b1) BatchNorm1d (train mode, batch stats) + ELU + fc2 ------------
def _bn_elu_fc2_kernel(h_ref, p_ref, w2_ref, b2_ref, out_ref, *, eps):
    # h_ref : (N, HID) f32   p_ref: (3, HID) f32 = [b1; gamma; beta]
    # w2_ref: (HID, OUT_PAD) bf16   b2_ref: (1, OUT_PAD) f32
    h = h_ref[...] + p_ref[0:1, :]                            # fc1 bias
    mean = jnp.mean(h, axis=0, keepdims=True)                 # full-batch statistics
    var = jnp.mean((h - mean) * (h - mean), axis=0, keepdims=True)
    h_bn = (h - mean) * jax.lax.rsqrt(var + eps) * p_ref[1:2, :] + p_ref[2:3, :]
    # ELU(alpha=1); expm1 is numerically tight near 0, clamp avoids overflow on the
    # discarded positive branch.
    h_act = jnp.where(h_bn > 0, h_bn, jnp.expm1(jnp.minimum(h_bn, 0.0)))
    out_ref[...] = jnp.dot(h_act.astype(jnp.bfloat16), w2_ref[...],
                           preferred_element_type=jnp.float32) + b2_ref[...]


def nonlinear_neck_v3(xs, params):
    """xs: tuple/list of NCHW feature maps (bf16 preferred). Uses xs[3] like the module."""
    x = xs[3]
    n, c, h, w = x.shape
    hw = h * w

    # NCHW -> (N, HW, C): C lands on the 128-lane axis, HW on sublanes.
    # TODO(synk): have the backbone emit NHWC directly to avoid this transpose pass.
    x_t = jnp.transpose(x, (0, 2, 3, 1)).reshape(n, hw, c).astype(jnp.bfloat16)

    w1, b1, gamma, beta, w2, b2 = params
    hid = w1.shape[1]
    out_c = w2.shape[1]

    # bf16 weights: halve VMEM/HBM residency, double MXU throughput (f32 accumulation).
    w1_bf = w1.astype(jnp.bfloat16)

    # Lane-dense output: pad out_channels to a multiple of 128, slice afterwards.
    out_pad = _round_up(out_c, 128)
    w2_bf = jnp.zeros((hid, out_pad), jnp.bfloat16).at[:, :out_c].set(w2.astype(jnp.bfloat16))
    b2_pad = jnp.zeros((1, out_pad), jnp.float32).at[:, :out_c].set(
        b2.reshape(1, -1).astype(jnp.float32))

    # Coalesce the three hid-length vectors into one input (single DMA).
    pvec = jnp.stack([b1.reshape(-1), gamma.reshape(-1), beta.reshape(-1)]
                     ).astype(jnp.float32)

    # Batch tile: large enough to feed MXU M, small enough to keep tiles a few MiB.
    if n % 128 == 0:
        tn = 128
    elif n % 8 == 0:
        tn = 8
    else:
        tn = n
    grid = (n // tn,)

    # Explicit VMEM budget (double-buffered x tile + h tile + w1), clamped for v7x.
    x_tile_b = tn * hw * c * 2
    h_tile_b = tn * hid * 4
    w1_b = c * hid * 2
    vmem_est = 2 * x_tile_b + 2 * h_tile_b + 2 * w1_b + (1 << 20)
    vmem_limit = int(min(max(vmem_est, 16 * 1024 * 1024), 48 * 1024 * 1024))

    h_full = pl.pallas_call(
        functools.partial(_pool_fc1_kernel, inv_hw=1.0 / float(hw)),
        out_shape=jax.ShapeDtypeStruct((n, hid), jnp.float32),
        grid=grid,
        in_specs=[pl.BlockSpec((tn, hw, c), lambda i: (i, 0, 0)),
                  pl.BlockSpec((c, hid), lambda i: (0, 0))],
        out_specs=pl.BlockSpec((tn, hid), lambda i: (i, 0)),
        compiler_params=pltpu.CompilerParams(
            dimension_semantics=("parallel",),
            vmem_limit_bytes=vmem_limit),
    )(x_t, w1_bf)

    out = pl.pallas_call(
        functools.partial(_bn_elu_fc2_kernel, eps=1e-5),
        out_shape=jax.ShapeDtypeStruct((n, out_pad), jnp.float32),
        in_specs=[pl.BlockSpec((n, hid), lambda: (0, 0)),
                  pl.BlockSpec((3, hid), lambda: (0, 0)),
                  pl.BlockSpec((hid, out_pad), lambda: (0, 0)),
                  pl.BlockSpec((1, out_pad), lambda: (0, 0))],
        out_specs=pl.BlockSpec((n, out_pad), lambda: (0, 0)),
    )(h_full, pvec, w2_bf, b2_pad)

    return [out[:, :out_c]]


def init_params(key, in_channels, hid_channels, out_channels):
    # Matches _init_weights(init_linear='normal', std=0.01, bias=0.0):
    #   Linear weights ~ N(0, 0.01), bias = 0; BN weight = 1, BN bias = 0.
    k1, k2 = jax.random.split(key)
    w1 = (0.01 * jax.random.normal(k1, (in_channels, hid_channels))).astype(jnp.float32)
    b1 = jnp.zeros((1, hid_channels), jnp.float32)
    gamma = jnp.ones((1, hid_channels), jnp.float32)
    beta = jnp.zeros((1, hid_channels), jnp.float32)
    w2 = (0.01 * jax.random.normal(k2, (hid_channels, out_channels))).astype(jnp.float32)
    b2 = jnp.zeros((1, out_channels), jnp.float32)
    return (w1, b1, gamma, beta, w2, b2)


def reference(xs, params):
    # Pure-JAX reference mirroring the kernel's precision choices (bf16 matmul
    # operands, f32 accumulation / elementwise) -- i.e. the PyTorch forward up to
    # documented bf16 rounding of the MXU inputs.
    x = xs[3].astype(jnp.float32)
    w1, b1, gamma, beta, w2, b2 = params
    pooled = jnp.mean(x, axis=(2, 3))
    h = jnp.dot(pooled.astype(jnp.bfloat16), w1.astype(jnp.bfloat16),
                preferred_element_type=jnp.float32) + b1.reshape(1, -1)
    mean = jnp.mean(h, axis=0, keepdims=True)
    var = jnp.mean((h - mean) ** 2, axis=0, keepdims=True)
    h_bn = (h - mean) * jax.lax.rsqrt(var + 1e-5) * gamma.reshape(1, -1) + beta.reshape(1, -1)
    h_act = jnp.where(h_bn > 0, h_bn, jnp.expm1(h_bn))
    return jnp.dot(h_act.astype(jnp.bfloat16), w2.astype(jnp.bfloat16),
                   preferred_element_type=jnp.float32) + b2.reshape(1, -1)


if __name__ == "__main__":
    key = jax.random.PRNGKey(0)
    kx, kp = jax.random.split(key)

    N, C, H, W = 16, 64, 8, 8
    HID, OUT = 128, 32

    # 4-element feature pyramid (bf16, the natural backbone dtype); module uses index 3.
    keys = jax.random.split(kx, 4)
    xs = tuple(jax.random.normal(keys[i], (N, C, H, W), jnp.float32).astype(jnp.bfloat16)
               for i in range(4))

    params = init_params(kp, C, HID, OUT)

    out = nonlinear_neck_v3(xs, params)[0]
    out = jax.block_until_ready(out)

    ref = reference(xs, params)
    assert out.shape == (N, OUT)
    assert jnp.allclose(out, ref, atol=5e-3, rtol=2e-2), "mismatch vs reference"

    print("KERNEL_OK")
</pallas_src>

<mosaic_0001>
module attributes {stable_mosaic.version = 11 : i64} {
  func.func @_pool_fc1_kernel(%arg0: i32, %arg1: memref<8x64x64xbf16, #tpu.memory_space<vmem>>, %arg2: memref<64x128xbf16, #tpu.memory_space<vmem>>, %arg3: memref<8x128xf32, #tpu.memory_space<vmem>>) attributes {dimension_semantics = [#tpu.dimension_semantics<parallel>], iteration_bounds = array<i64: 2>, scalar_prefetch = 0 : i64, scratch_operands = 0 : i64, tpu.core_type = #tpu.core_type<tc>, window_params = [{transform_indices = @transform_0, window_bounds = array<i64: 8, 64, 64>}, {pipeline_mode = #tpu.pipeline_mode<synchronous>, transform_indices = @transform_1, window_bounds = array<i64: 64, 128>}, {transform_indices = @transform_2, window_bounds = array<i64: 8, 128>}]} {
    %c0 = arith.constant 0 : index
    %c0_0 = arith.constant 0 : index
    %c0_1 = arith.constant 0 : index
    %0 = vector.load %arg1[%c0, %c0_0, %c0_1] : memref<8x64x64xbf16, #tpu.memory_space<vmem>>, vector<8x64x64xbf16>
    %1 = arith.extf %0 : vector<8x64x64xbf16> to vector<8x64x64xf32>
    %cst = arith.constant dense<0.000000e+00> : vector<8x64xf32>
    %2 = vector.multi_reduction <add>, %1, %cst [1] : vector<8x64x64xf32> to vector<8x64xf32>
    %cst_2 = arith.constant 1.562500e-02 : f32
    %3 = vector.broadcast %cst_2 : f32 to vector<8x64xf32>
    %4 = arith.mulf %2, %3 : vector<8x64xf32>
    %5 = arith.truncf %4 : vector<8x64xf32> to vector<8x64xbf16>
    %c0_3 = arith.constant 0 : index
    %c0_4 = arith.constant 0 : index
    %6 = vector.load %arg2[%c0_3, %c0_4] : memref<64x128xbf16, #tpu.memory_space<vmem>>, vector<64x128xbf16>
    %cst_5 = arith.constant dense<0.000000e+00> : vector<8x128xf32>
    %7 = tpu.matmul %5, %6, %cst_5 {dimension_numbers = #tpu.dot_dimension_numbers<[1], [0], [0], [1], [0, 0, 1, 1], [], []>} : vector<8x64xbf16>, vector<64x128xbf16>, vector<8x128xf32> -> vector<8x128xf32>
    %c0_6 = arith.constant 0 : index
    %c0_7 = arith.constant 0 : index
    %8 = vector.load %arg3[%c0_6, %c0_7] : memref<8x128xf32, #tpu.memory_space<vmem>>, vector<8x128xf32>
    tpu.vector_store %arg3[%c0_6, %c0_7], %7 {strides = array<i32>} : memref<8x128xf32, #tpu.memory_space<vmem>>, vector<8x128xf32>,
    return
  }
  func.func @transform_0(%arg0: i32) -> (i32, i32, i32) {
    %c0_i32 = arith.constant 0 : i32
    %c0_i32_0 = arith.constant 0 : i32
    %c0_i32_1 = arith.constant 0 : i32
    return %arg0, %c0_i32, %c0_i32_0 : i32, i32, i32
  }
  func.func @transform_1(%arg0: i32) -> (i32, i32) {
    %c0_i32 = arith.constant 0 : i32
    %c0_i32_0 = arith.constant 0 : i32
    %c0_i32_1 = arith.constant 0 : i32
    return %c0_i32, %c0_i32_0 : i32, i32
  }
  func.func @transform_2(%arg0: i32) -> (i32, i32) {
    %c0_i32 = arith.constant 0 : i32
    %c0_i32_0 = arith.constant 0 : i32
    return %arg0, %c0_i32 : i32, i32
  }
}

</mosaic_0001>

<llo_original>
// kernel: tpu_custom_call.1
$region0: #{tpu_custom_call.1}
  #allocation0 [shape = 'u32[]', space=smem, size = 0x4, offset = 0x4, fixed_abs, tag = 'smem constant byte address 0x4 - core index']
  #allocation1 [shape = 'u32[144,128]{1,0:T(1,128)}', space=vmem, size = 0x12000, scoped, tag = 'internal scratch']
  %s0 = inlined_call_operand.hbm [shape: bf16[16,64,64], index: 0, kind: input, shape index: {}]
  %s1 = inlined_call_operand.hbm [shape: bf16[64,128], index: 1, kind: input, shape index: {}]
  %s2 = inlined_call_operand.hbm [shape: f32[16,128], index: 2, kind: output, shape index: {}]
  %s3 = sld [smem:[#allocation0]]
  $region49: #{tpu_custom_call.1} parent=0
    _
  %s5 = ssub.s32 1, %s3
  %s6 = scalar_select 0, %s5, %s3
  $region1: #{tpu_custom_call.1} parent=0
    #allocation2 [shape = 'u8[262144]{0}', space=vmem, size = 0x40000, scoped, tag = 'input window, operand 0']
    #allocation3 [shape = 's32[2]{0}', space=sflag, size = 0x8, scoped, tag = 'scoped memory for tpu_custom_call.1']
    #allocation4 [shape = 's32[2]{0}', space=sflag, size = 0x8, scoped, tag = 'scoped memory for tpu_custom_call.1']
    #allocation5 [shape = 'u8[16384]{0}', space=vmem, size = 0x4000, scoped, tag = 'input window, operand 1, single buffered']
    #allocation6 [shape = 's32[1]{0}', space=sflag, size = 0x4, scoped, tag = 'scoped memory for tpu_custom_call.1']
    #allocation7 [shape = 'u8[8192]{0}', space=vmem, size = 0x2000, scoped, tag = 'output window, operand 0']
    %7 = vsyncpa [#allocation3], 0
    %s8 = scalar_lea.sflag [#allocation3], 1
    %9 = vsyncpa %s8, 0
    %10 = vsyncpa [#allocation6], 0
    %11 = vsyncpa [#allocation4], 0
    %s12 = scalar_lea.sflag [#allocation4], 1
    %13 = vsyncpa %s12, 0
    loop: start=0, step=1, limit=4
    $region2: #{tpu_custom_call.1} parent=1 // loop_pre_header
      _
    $region3: #{tpu_custom_call.1} parent=1 // loop_header
      %s15 = sphi 0, %s19
      %p16 = scmp.ge.s32.totalorder %s15, 4
      %s25 = sphi 0, %s27
      %s28 = sphi 0, %s25
      %s29 = sphi 0, %s28
      %s45 = sphi 0, %s29
      %s49 = sphi 0, %s49
      %s51 = sphi 0, %s49
      %s52 = sphi 0, %s51
      %s66 = sphi 0, %s52
      %s72 = sphi 0, %s74
      %s75 = sphi 0, %s72
      %s76 = sphi 0, %s75
      %s92 = sphi 0, %s76
    $region4: #{tpu_custom_call.1} parent=1 // loop_header_branch
      %18 = sbr.rel (%p16) target = $region8
    $region5: #{tpu_custom_call.1} parent=1 // loop_body
      %s20 = ssub.s32 %s15, 1
      %s21 = ssub.s32 %s15, 2
      %s22 = sadd.s32 %s15, 1
      %s23 = ssub.s32 %s15, %s22
      %p24 = scmp.eq.s32.totalorder %s23, 0
      %s26 = sadd.s32 %s25, 1
      %s27 = scalar_select %p24, %s25, %s26
      %p30 = pneg %p24
      %p31 = scmp.eq.s32.totalorder %s15, 1
      %p32 = por %p30, %p31
      %p33 = scmp.ne.s32.totalorder %s25, %s28
      %p34 = scmp.eq.s32.totalorder %s15, 0
      %p35 = por %p33, %p34
      %p36 = scmp.ne.s32.totalorder %s25, %s28
      %p37 = scmp.eq.s32.totalorder %s20, 1
      %p38 = por %p36, %p37
      %p39 = scmp.ne.s32.totalorder %s28, %s29
      %p40 = scmp.eq.s32.totalorder %s20, 0
      %p41 = por %p39, %p40
      %p42 = scmp.ne.s32.totalorder %s28, %s29
      %p43 = scmp.eq.s32.totalorder %s21, 1
      %p44 = por %p42, %p43
      %p46 = scmp.ne.s32.totalorder %s29, %s45
      %p47 = scmp.eq.s32.totalorder %s21, 0
      %p48 = por %p46, %p47
      %s50 = sadd.s32 %s49, 1
      %p53 = scmp.eq.s32.totalorder %s15, 1
      %p54 = scmp.ne.s32.totalorder %s49, %s51
      %p55 = scmp.eq.s32.totalorder %s15, 0
      %p56 = por %p54, %p55
      %p57 = scmp.ne.s32.totalorder %s49, %s51
      %p58 = scmp.eq.s32.totalorder %s20, 1
      %p59 = por %p57, %p58
      %p60 = scmp.ne.s32.totalorder %s51, %s52
      %p61 = scmp.eq.s32.totalorder %s20, 0
      %p62 = por %p60, %p61
      %p63 = scmp.ne.s32.totalorder %s51, %s52
      %p64 = scmp.eq.s32.totalorder %s21, 1
      %p65 = por %p63, %p64
      %p67 = scmp.ne.s32.totalorder %s52, %s66
      %p68 = scmp.eq.s32.totalorder %s21, 0
      %p69 = por %p67, %p68
      %s70 = ssub.s32 %s15, %s22
      %p71 = scmp.eq.s32.totalorder %s70, 0
      %s73 = sadd.s32 %s72, 1
      %s74 = scalar_select %p71, %s72, %s73
      %p77 = pneg %p71
      %p78 = scmp.eq.s32.totalorder %s15, 1
      %p79 = por %p77, %p78
      %p80 = scmp.ne.s32.totalorder %s72, %s75
      %p81 = scmp.eq.s32.totalorder %s15, 0
      %p82 = por %p80, %p81
      %p83 = scmp.ne.s32.totalorder %s72, %s75
      %p84 = scmp.eq.s32.totalorder %s20, 1
      %p85 = por %p83, %p84
      %p86 = scmp.ne.s32.totalorder %s75, %s76
      %p87 = scmp.eq.s32.totalorder %s20, 0
      %p88 = por %p86, %p87
      %p89 = scmp.ne.s32.totalorder %s75, %s76
      %p90 = scmp.eq.s32.totalorder %s21, 1
      %p91 = por %p89, %p90
      %p93 = scmp.ne.s32.totalorder %s76, %s92
      %p94 = scmp.eq.s32.totalorder %s21, 0
      %p95 = por %p93, %p94
      %p96 = scmp.le.s32.totalorder 1, %s15
      %p97 = scmp.lt.s32.totalorder %s15, 3
      %p98 = pnand %p96, %p97
      %p99 = pneg %p98
      // Predicated region
      $region9: #{tpu_custom_call.1} parent=5 // pred_check
        _
      $region10: #{tpu_custom_call.1} parent=5 // pred_check_branch
        %101 = sbr.rel (%p98) target = $region12
      $region11: #{tpu_custom_call.1} parent=5 // pred_region
        %s102 = ssub.s32 %s15, 1
        // Predicated region
        $region13: #{tpu_custom_call.1} parent=11 // pred_check
          %p103 = pneg %p62
        $region14: #{tpu_custom_call.1} parent=11 // pred_check_branch
          %105 = sbr.rel (%p103) target = $region16
        $region15: #{tpu_custom_call.1} parent=11 // pred_region
          %s107 = ssub.s32 512, 512
          %108 = vsyncadd [#allocation6], %s107
          %s109 = sshll.u32 [#allocation5], 4
          %s110 = int_to_ptr.vmem [resolvable:$true] %s109
          %115 = dma.hbm_to_vmem [thread:$0]  %s1, 512, %s110, [#allocation6], 64, 64, 4
        $region16: #{tpu_custom_call.1} parent=11 // pred_fallthru
          _
      $region12: #{tpu_custom_call.1} parent=5 // pred_fallthru
        _
      %p116 = scmp.lt.s32.totalorder %s15, 2
      // Predicated region
      $region17: #{tpu_custom_call.1} parent=5 // pred_check
        %p117 = pneg %p116
      $region18: #{tpu_custom_call.1} parent=5 // pred_check_branch
        %119 = sbr.rel (%p117) target = $region20
      $region19: #{tpu_custom_call.1} parent=5 // pred_region
        // Predicated region
        $region21: #{tpu_custom_call.1} parent=19 // pred_check
          %p120 = pneg %p35
        $region22: #{tpu_custom_call.1} parent=19 // pred_check_branch
          %122 = sbr.rel (%p120) target = $region24
        $region23: #{tpu_custom_call.1} parent=19 // pred_region
          %s123 = sand.u32 %s25, 1
          %s124 = scalar_lea.sflag [#allocation3], %s123
          %s125 = sand.u32 %s25, 1
          %s126 = smul.addr %s125, 256
          %s127 = scalar_lea.vmem [#allocation2], %s126
          %s128 = smul.u32 8, %s15
          %s130 = ssub.s32 4096, 4096
          %131 = vsyncadd %s124, %s130
          %s132 = smul.addr %s128, 8
          %s133 = smul.addr %s132, 64
          %s134 = scalar_lea.hbm %s0, %s133
          %s135 = sshll.u32 %s127, 4
          %s136 = int_to_ptr.vmem [resolvable:$true] %s135
          %141 = dma.hbm_to_vmem [thread:$0]  %s134, 4096, %s136, %s124, 64, 64, 4
        $region24: #{tpu_custom_call.1} parent=19 // pred_fallthru
          _
      $region20: #{tpu_custom_call.1} parent=5 // pred_fallthru
        _
      %p142 = scmp.le.s32.totalorder 1, %s15
      %p143 = scmp.lt.s32.totalorder %s15, 3
      %p144 = pnand %p142, %p143
      %p145 = pneg %p144
      // Predicated region
      $region25: #{tpu_custom_call.1} parent=5 // pred_check
        _
      $region26: #{tpu_custom_call.1} parent=5 // pred_check_branch
        %147 = sbr.rel (%p144) target = $region28
      $region27: #{tpu_custom_call.1} parent=5 // pred_region
        %s148 = ssub.s32 %s15, 1
        %s149 = sand.u32 %s28, 1
        %s150 = scalar_lea.sflag [#allocation3], %s149
        %s151 = sand.u32 %s28, 1
        %s152 = smul.addr %s151, 256
        %s153 = scalar_lea.vmem [#allocation2], %s152
        // Predicated region
        $region29: #{tpu_custom_call.1} parent=27 // pred_check
          %p154 = pneg %p41
        $region30: #{tpu_custom_call.1} parent=27 // pred_check_branch
          %156 = sbr.rel (%p154) target = $region32
        $region31: #{tpu_custom_call.1} parent=27 // pred_region
          %157 = dma.done %s150, 4096
        $region32: #{tpu_custom_call.1} parent=27 // pred_fallthru
          _
        // Predicated region
        $region33: #{tpu_custom_call.1} parent=27 // pred_check
          %p158 = pneg %p62
        $region34: #{tpu_custom_call.1} parent=27 // pred_check_branch
          %160 = sbr.rel (%p158) target = $region36
        $region35: #{tpu_custom_call.1} parent=27 // pred_region
          %161 = dma.done [#allocation6], 512
        $region36: #{tpu_custom_call.1} parent=27 // pred_fallthru
          _
        %s162 = sand.u32 %s28, 1
        %s163 = scalar_lea.sflag [#allocation3], %s162
        %s164 = sand.u32 %s28, 1
        %s165 = smul.addr %s164, 256
        %s166 = scalar_lea.vmem [#allocation2], %s165
        %p167 = pneg %p41
        %p168 = pneg %p38
        %p169 = pneg %p62
        %p170 = pneg %p59
        %p171 = pneg %p88
        %p172 = pneg %p85
        %s173 = sand.u32 %s75, 1
        %s174 = scalar_lea.sflag [#allocation4], %s173
        %s175 = sand.u32 %s75, 1
        %s176 = smul.addr %s175, 8
        %s177 = scalar_lea.vmem [#allocation7], %s176
        %s178 = smul.u32 8, %s20
        %v180 = vld [vmem:[%s153] sm:$0xf]
        %v181 = vld [vmem:[%s153 + $0x4] sm:$0xf]
        %v182 = vld [vmem:[%s153 + $0x8] sm:$0xf]
        %v183 = vld [vmem:[%s153 + $0xc] sm:$0xf]
        %v184 = vld [vmem:[%s153 + $0x10] sm:$0xf]
        %v185 = vld [vmem:[%s153 + $0x14] sm:$0xf]
        %v186 = vld [vmem:[%s153 + $0x18] sm:$0xf]
        %v187 = vld [vmem:[%s153 + $0x1c] sm:$0xf]
        %v188 = vld [vmem:[%s153 + $0x20] sm:$0xf]
        %v189 = vld [vmem:[%s153 + $0x24] sm:$0xf]
        %v190 = vld [vmem:[%s153 + $0x28] sm:$0xf]
        %v191 = vld [vmem:[%s153 + $0x2c] sm:$0xf]
        %v192 = vld [vmem:[%s153 + $0x30] sm:$0xf]
        %v193 = vld [vmem:[%s153 + $0x34] sm:$0xf]
        %v194 = vld [vmem:[%s153 + $0x38] sm:$0xf]
        %v195 = vld [vmem:[%s153 + $0x3c] sm:$0xf]
        %v196 = vld [vmem:[%s153 + $0x40] sm:$0xf]
        %v197 = vld [vmem:[%s153 + $0x44] sm:$0xf]
        %v198 = vld [vmem:[%s153 + $0x48] sm:$0xf]
        %v199 = vld [vmem:[%s153 + $0x4c] sm:$0xf]
        %v200 = vld [vmem:[%s153 + $0x50] sm:$0xf]
        %v201 = vld [vmem:[%s153 + $0x54] sm:$0xf]
        %v202 = vld [vmem:[%s153 + $0x58] sm:$0xf]
        %v203 = vld [vmem:[%s153 + $0x5c] sm:$0xf]
        %v204 = vld [vmem:[%s153 + $0x60] sm:$0xf]
        %v205 = vld [vmem:[%s153 + $0x64] sm:$0xf]
        %v206 = vld [vmem:[%s153 + $0x68] sm:$0xf]
        %v207 = vld [vmem:[%s153 + $0x6c] sm:$0xf]
        %v208 = vld [vmem:[%s153 + $0x70] sm:$0xf]
        %v209 = vld [vmem:[%s153 + $0x74] sm:$0xf]
        %v210 = vld [vmem:[%s153 + $0x78] sm:$0xf]
        %v211 = vld [vmem:[%s153 + $0x7c] sm:$0xf]
        %v212 = vld [vmem:[%s153 + $0x80] sm:$0xf]
        %v213 = vld [vmem:[%s153 + $0x84] sm:$0xf]
        %v214 = vld [vmem:[%s153 + $0x88] sm:$0xf]
        %v215 = vld [vmem:[%s153 + $0x8c] sm:$0xf]
        %v216 = vld [vmem:[%s153 + $0x90] sm:$0xf]
        %v217 = vld [vmem:[%s153 + $0x94] sm:$0xf]
        %v218 = vld [vmem:[%s153 + $0x98] sm:$0xf]
        %v219 = vld [vmem:[%s153 + $0x9c] sm:$0xf]
        %v220 = vld [vmem:[%s153 + $0xa0] sm:$0xf]
        %v221 = vld [vmem:[%s153 + $0xa4] sm:$0xf]
        %v222 = vld [vmem:[%s153 + $0xa8] sm:$0xf]
        %v223 = vld [vmem:[%s153 + $0xac] sm:$0xf]
        %v224 = vld [vmem:[%s153 + $0xb0] sm:$0xf]
        %v225 = vld [vmem:[%s153 + $0xb4] sm:$0xf]
        %v226 = vld [vmem:[%s153 + $0xb8] sm:$0xf]
        %v227 = vld [vmem:[%s153 + $0xbc] sm:$0xf]
        %v228 = vld [vmem:[%s153 + $0xc0] sm:$0xf]
        %v229 = vld [vmem:[%s153 + $0xc4] sm:$0xf]
        %v230 = vld [vmem:[%s153 + $0xc8] sm:$0xf]
        %v231 = vld [vmem:[%s153 + $0xcc] sm:$0xf]
        %v232 = vld [vmem:[%s153 + $0xd0] sm:$0xf]
        %v233 = vld [vmem:[%s153 + $0xd4] sm:$0xf]
        %v234 = vld [vmem:[%s153 + $0xd8] sm:$0xf]
        %v235 = vld [vmem:[%s153 + $0xdc] sm:$0xf]
        %v236 = vld [vmem:[%s153 + $0xe0] sm:$0xf]
        %v237 = vld [vmem:[%s153 + $0xe4] sm:$0xf]
        %v238 = vld [vmem:[%s153 + $0xe8] sm:$0xf]
        %v239 = vld [vmem:[%s153 + $0xec] sm:$0xf]
        %v240 = vld [vmem:[%s153 + $0xf0] sm:$0xf]
        %v241 = vld [vmem:[%s153 + $0xf4] sm:$0xf]
        %v242 = vld [vmem:[%s153 + $0xf8] sm:$0xf]
        %v243 = vld [vmem:[%s153 + $0xfc] sm:$0xf]
        %v244 = vunpack.c.l.bf16 %v180
        %v245 = vunpack.c.l.bf16 %v181
        %v246 = vunpack.c.l.bf16 %v182
        %v247 = vunpack.c.l.bf16 %v183
        %v248 = vunpack.c.l.bf16 %v184
        %v249 = vunpack.c.l.bf16 %v185
        %v250 = vunpack.c.l.bf16 %v186
        %v251 = vunpack.c.l.bf16 %v187
        %v252 = vunpack.c.l.bf16 %v188
        %v253 = vunpack.c.l.bf16 %v189
        %v254 = vunpack.c.l.bf16 %v190
        %v255 = vunpack.c.l.bf16 %v191
        %v256 = vunpack.c.l.bf16 %v192
        %v257 = vunpack.c.l.bf16 %v193
        %v258 = vunpack.c.l.bf16 %v194
        %v259 = vunpack.c.l.bf16 %v195
        %v260 = vunpack.c.l.bf16 %v196
        %v261 = vunpack.c.l.bf16 %v197
        %v262 = vunpack.c.l.bf16 %v198
        %v263 = vunpack.c.l.bf16 %v199
        %v264 = vunpack.c.l.bf16 %v200
        %v265 = vunpack.c.l.bf16 %v201
        %v266 = vunpack.c.l.bf16 %v202
        %v267 = vunpack.c.l.bf16 %v203
        %v268 = vunpack.c.l.bf16 %v204
        %v269 = vunpack.c.l.bf16 %v205
        %v270 = vunpack.c.l.bf16 %v206
        %v271 = vunpack.c.l.bf16 %v207
        %v272 = vunpack.c.l.bf16 %v208
        %v273 = vunpack.c.l.bf16 %v209
        %v274 = vunpack.c.l.bf16 %v210
        %v275 = vunpack.c.l.bf16 %v211
        %v276 = vunpack.c.l.bf16 %v212
        %v277 = vunpack.c.l.bf16 %v213
        %v278 = vunpack.c.l.bf16 %v214
        %v279 = vunpack.c.l.bf16 %v215
        %v280 = vunpack.c.l.bf16 %v216
        %v281 = vunpack.c.l.bf16 %v217
        %v282 = vunpack.c.l.bf16 %v218
        %v283 = vunpack.c.l.bf16 %v219
        %v284 = vunpack.c.l.bf16 %v220
        %v285 = vunpack.c.l.bf16 %v221
        %v286 = vunpack.c.l.bf16 %v222
        %v287 = vunpack.c.l.bf16 %v223
        %v288 = vunpack.c.l.bf16 %v224
        %v289 = vunpack.c.l.bf16 %v225
        %v290 = vunpack.c.l.bf16 %v226
        %v291 = vunpack.c.l.bf16 %v227
        %v292 = vunpack.c.l.bf16 %v228
        %v293 = vunpack.c.l.bf16 %v229
        %v294 = vunpack.c.l.bf16 %v230
        %v295 = vunpack.c.l.bf16 %v231
        %v296 = vunpack.c.l.bf16 %v232
        %v297 = vunpack.c.l.bf16 %v233
        %v298 = vunpack.c.l.bf16 %v234
        %v299 = vunpack.c.l.bf16 %v235
        %v300 = vunpack.c.l.bf16 %v236
        %v301 = vunpack.c.l.bf16 %v237
        %v302 = vunpack.c.l.bf16 %v238
        %v303 = vunpack.c.l.bf16 %v239
        %v304 = vunpack.c.l.bf16 %v240
        %v305 = vunpack.c.l.bf16 %v241
        %v306 = vunpack.c.l.bf16 %v242
        %v307 = vunpack.c.l.bf16 %v243
        %vm308 = vcmask 523264
        %v309 = vsel %vm308, %v244, 0.0
        %v310 = vsel %vm308, %v245, 0.0
        %v311 = vadd.f32 %v309, %v310
        %v312 = vsel %vm308, %v246, 0.0
        %v313 = vadd.f32 %v311, %v312
        %v314 = vsel %vm308, %v247, 0.0
        %v315 = vadd.f32 %v313, %v314
        %v316 = vsel %vm308, %v248, 0.0
        %v317 = vadd.f32 %v315, %v316
        %v318 = vsel %vm308, %v249, 0.0
        %v319 = vadd.f32 %v317, %v318
        %v320 = vsel %vm308, %v250, 0.0
        %v321 = vadd.f32 %v319, %v320
        %v322 = vsel %vm308, %v251, 0.0
        %v323 = vadd.f32 %v321, %v322
        %v324 = vrot.slane %v323, 4
        %v325 = vadd.f32 %v323, %v324
        %v326 = vrot.slane %v325, 2
        %v327 = vadd.f32 %v325, %v326
        %v328 = vrot.slane %v327, 1
        %v329 = vadd.f32 %v327, %v328
        %v330 = vsel %vm308, %v252, 0.0
        %v331 = vsel %vm308, %v253, 0.0
        %v332 = vadd.f32 %v330, %v331
        %v333 = vsel %vm308, %v254, 0.0
        %v334 = vadd.f32 %v332, %v333
        %v335 = vsel %vm308, %v255, 0.0
        %v336 = vadd.f32 %v334, %v335
        %v337 = vsel %vm308, %v256, 0.0
        %v338 = vadd.f32 %v336, %v337
        %v339 = vsel %vm308, %v257, 0.0
        %v340 = vadd.f32 %v338, %v339
        %v341 = vsel %vm308, %v258, 0.0
        %v342 = vadd.f32 %v340, %v341
        %v343 = vsel %vm308, %v259, 0.0
        %v344 = vadd.f32 %v342, %v343
        %v345 = vrot.slane %v344, 4
        %v346 = vadd.f32 %v344, %v345
        %v347 = vrot.slane %v346, 2
        %v348 = vadd.f32 %v346, %v347
        %v349 = vrot.slane %v348, 1
        %v350 = vadd.f32 %v348, %v349
        %v351 = vsel %vm308, %v260, 0.0
        %v352 = vsel %vm308, %v261, 0.0
        %v353 = vadd.f32 %v351, %v352
        %v354 = vsel %vm308, %v262, 0.0
        %v355 = vadd.f32 %v353, %v354
        %v356 = vsel %vm308, %v263, 0.0
        %v357 = vadd.f32 %v355, %v356
        %v358 = vsel %vm308, %v264, 0.0
        %v359 = vadd.f32 %v357, %v358
        %v360 = vsel %vm308, %v265, 0.0
        %v361 = vadd.f32 %v359, %v360
        %v362 = vsel %vm308, %v266, 0.0
        %v363 = vadd.f32 %v361, %v362
        %v364 = vsel %vm308, %v267, 0.0
        %v365 = vadd.f32 %v363, %v364
        %v366 = vrot.slane %v365, 4
        %v367 = vadd.f32 %v365, %v366
        %v368 = vrot.slane %v367, 2
        %v369 = vadd.f32 %v367, %v368
        %v370 = vrot.slane %v369, 1
        %v371 = vadd.f32 %v369, %v370
        %v372 = vsel %vm308, %v268, 0.0
        %v373 = vsel %vm308, %v269, 0.0
        %v374 = vadd.f32 %v372, %v373
        %v375 = vsel %vm308, %v270, 0.0
        %v376 = vadd.f32 %v374, %v375
        %v377 = vsel %vm308, %v271, 0.0
        %v378 = vadd.f32 %v376, %v377
        %v379 = vsel %vm308, %v272, 0.0
        %v380 = vadd.f32 %v378, %v379
        %v381 = vsel %vm308, %v273, 0.0
        %v382 = vadd.f32 %v380, %v381
        %v383 = vsel %vm308, %v274, 0.0
        %v384 = vadd.f32 %v382, %v383
        %v385 = vsel %vm308, %v275, 0.0
        %v386 = vadd.f32 %v384, %v385
        %v387 = vrot.slane %v386, 4
        %v388 = vadd.f32 %v386, %v387
        %v389 = vrot.slane %v388, 2
        %v390 = vadd.f32 %v388, %v389
        %v391 = vrot.slane %v390, 1
        %v392 = vadd.f32 %v390, %v391
        %v393 = vsel %vm308, %v276, 0.0
        %v394 = vsel %vm308, %v277, 0.0
        %v395 = vadd.f32 %v393, %v394
        %v396 = vsel %vm308, %v278, 0.0
        %v397 = vadd.f32 %v395, %v396
        %v398 = vsel %vm308, %v279, 0.0
        %v399 = vadd.f32 %v397, %v398
        %v400 = vsel %vm308, %v280, 0.0
        %v401 = vadd.f32 %v399, %v400
        %v402 = vsel %vm308, %v281, 0.0
        %v403 = vadd.f32 %v401, %v402
        %v404 = vsel %vm308, %v282, 0.0
        %v405 = vadd.f32 %v403, %v404
        %v406 = vsel %vm308, %v283, 0.0
        %v407 = vadd.f32 %v405, %v406
        %v408 = vrot.slane %v407, 4
        %v409 = vadd.f32 %v407, %v408
        %v410 = vrot.slane %v409, 2
        %v411 = vadd.f32 %v409, %v410
        %v412 = vrot.slane %v411, 1
        %v413 = vadd.f32 %v411, %v412
        %v414 = vsel %vm308, %v284, 0.0
        %v415 = vsel %vm308, %v285, 0.0
        %v416 = vadd.f32 %v414, %v415
        %v417 = vsel %vm308, %v286, 0.0
        %v418 = vadd.f32 %v416, %v417
        %v419 = vsel %vm308, %v287, 0.0
        %v420 = vadd.f32 %v418, %v419
        %v421 = vsel %vm308, %v288, 0.0
        %v422 = vadd.f32 %v420, %v421
        %v423 = vsel %vm308, %v289, 0.0
        %v424 = vadd.f32 %v422, %v423
        %v425 = vsel %vm308, %v290, 0.0
        %v426 = vadd.f32 %v424, %v425
        %v427 = vsel %vm308, %v291, 0.0
        %v428 = vadd.f32 %v426, %v427
        %v429 = vrot.slane %v428, 4
        %v430 = vadd.f32 %v428, %v429
        %v431 = vrot.slane %v430, 2
        %v432 = vadd.f32 %v430, %v431
        %v433 = vrot.slane %v432, 1
        %v434 = vadd.f32 %v432, %v433
        %v435 = vsel %vm308, %v292, 0.0
        %v436 = vsel %vm308, %v293, 0.0
        %v437 = vadd.f32 %v435, %v436
        %v438 = vsel %vm308, %v294, 0.0
        %v439 = vadd.f32 %v437, %v438
        %v440 = vsel %vm308, %v295, 0.0
        %v441 = vadd.f32 %v439, %v440
        %v442 = vsel %vm308, %v296, 0.0
        %v443 = vadd.f32 %v441, %v442
        %v444 = vsel %vm308, %v297, 0.0
        %v445 = vadd.f32 %v443, %v444
        %v446 = vsel %vm308, %v298, 0.0
        %v447 = vadd.f32 %v445, %v446
        %v448 = vsel %vm308, %v299, 0.0
        %v449 = vadd.f32 %v447, %v448
        %v450 = vrot.slane %v449, 4
        %v451 = vadd.f32 %v449, %v450
        %v452 = vrot.slane %v451, 2
        %v453 = vadd.f32 %v451, %v452
        %v454 = vrot.slane %v453, 1
        %v455 = vadd.f32 %v453, %v454
        %v456 = vsel %vm308, %v300, 0.0
        %v457 = vsel %vm308, %v301, 0.0
        %v458 = vadd.f32 %v456, %v457
        %v459 = vsel %vm308, %v302, 0.0
        %v460 = vadd.f32 %v458, %v459
        %v461 = vsel %vm308, %v303, 0.0
        %v462 = vadd.f32 %v460, %v461
        %v463 = vsel %vm308, %v304, 0.0
        %v464 = vadd.f32 %v462, %v463
        %v465 = vsel %vm308, %v305, 0.0
        %v466 = vadd.f32 %v464, %v465
        %v467 = vsel %vm308, %v306, 0.0
        %v468 = vadd.f32 %v466, %v467
        %v469 = vsel %vm308, %v307, 0.0
        %v470 = vadd.f32 %v468, %v469
        %v471 = vrot.slane %v470, 4
        %v472 = vadd.f32 %v470, %v471
        %v473 = vrot.slane %v472, 2
        %v474 = vadd.f32 %v472, %v473
        %v475 = vrot.slane %v474, 1
        %v476 = vadd.f32 %v474, %v475
        %v477 = vmul.f32 %v329, 0.015625
        %v478 = vmul.f32 %v350, 0.015625
        %v479 = vmul.f32 %v371, 0.015625
        %v480 = vmul.f32 %v392, 0.015625
        %v481 = vmul.f32 %v413, 0.015625
        %v482 = vmul.f32 %v434, 0.015625
        %v483 = vmul.f32 %v455, 0.015625
        %v484 = vmul.f32 %v476, 0.015625
        %v485 = vpack.c.bf16 %v477, %v477
        %v486 = vpack.c.bf16 %v478, %v478
        %v487 = vpack.c.bf16 %v479, %v479
        %v488 = vpack.c.bf16 %v480, %v480
        %v489 = vpack.c.bf16 %v481, %v481
        %v490 = vpack.c.bf16 %v482, %v482
        %v491 = vpack.c.bf16 %v483, %v483
        %v492 = vpack.c.bf16 %v484, %v484
        %v493 = vld [vmem:[#allocation5] sm:$0xf]
        %v494 = vld [vmem:[#allocation5 + $0x4] sm:$0xf]
        %v495 = vld [vmem:[#allocation5 + $0x8] sm:$0xf]
        %v496 = vld [vmem:[#allocation5 + $0xc] sm:$0xf]
        %v497 = vld [vmem:[#allocation5 + $0x10] sm:$0xf]
        %v498 = vld [vmem:[#allocation5 + $0x14] sm:$0xf]
        %v499 = vld [vmem:[#allocation5 + $0x18] sm:$0xf]
        %v500 = vld [vmem:[#allocation5 + $0x1c] sm:$0xf]
        %v509 = vunpack.c.l.b16 %v485
        %v510 = vunpack.c.l.b16 %v486
        %v511 = vunpack.c.l.b16 %v487
        %v512 = vunpack.c.l.b16 %v488
        %v513 = vunpack.c.l.b16 %v489
        %v514 = vunpack.c.l.b16 %v490
        %v515 = vunpack.c.l.b16 %v491
        %v516 = vunpack.c.l.b16 %v492
        %vm517 = vcmask 1041409
        %v518 = vsel %vm517, %v510, %v509
        %vm519 = vcmask 1042434
        %v520 = vsel %vm519, %v511, %v518
        %vm521 = vcmask 1043459
        %v522 = vsel %vm521, %v512, %v520
        %vm523 = vcmask 1044484
        %v524 = vsel %vm523, %v513, %v522
        %vm525 = vcmask 1045509
        %v526 = vsel %vm525, %v514, %v524
        %vm527 = vcmask 1046534
        %v528 = vsel %vm527, %v515, %v526
        %vm529 = vcmask 1047559
        %v530 = vsel %vm529, %v516, %v528
        %v531 = vpack.c.b16 %v530, %v530
        %v540 = vunpack.c.l.b16 %v493
        %v541 = vunpack.c.l.b16 %v494
        %v542 = vunpack.c.l.b16 %v495
        %v543 = vunpack.c.l.b16 %v496
        %v544 = vunpack.c.l.b16 %v497
        %v545 = vunpack.c.l.b16 %v498
        %v546 = vunpack.c.l.b16 %v499
        %v547 = vunpack.c.l.b16 %v500
        %v548 = vpack.c.b16 %v541, %v540
        %v549 = vpack.c.b16 %v543, %v542
        %v550 = vpack.c.b16 %v545, %v544
        %v551 = vpack.c.b16 %v547, %v546
        %v557 = vsel %vm308, %v531, 0
        %559 = vmatprep.subr.bf16.mxu0 0
        %560 = vmatpush1.bf16.msra.mxu0 %v548
        %561 = vmatprep.subr.bf16.mxu0 0
        %562 = vmatpush1.bf16.msra.mxu0 %v549
        %563 = vmatprep.subr.bf16.mxu0 0
        %564 = vmatpush1.bf16.msra.mxu0 %v550
        %565 = vmatprep.subr.bf16.mxu0 0
        %566 = vmatpush1.bf16.msra.mxu0 %v551
        %567 = vmatprep.subr.bf16.mxu0 0
        %568 = vmatpush1.bf16.msra.mxu0 0
        %569 = vmatprep.subr.bf16.mxu0 0
        %570 = vmatpush1.bf16.msra.mxu0 0
        %571 = vmatprep.subr.bf16.mxu0 0
        %572 = vmatpush1.bf16.msra.mxu0 0
        %573 = vmatprep.subr.bf16.mxu0 0
        %574 = vmatpush1.bf16.msra.mxu0 0
        %575 = vmatprep.subr.bf16.mxu0 0
        %576 = vmatpush1.bf16.msra.mxu0 0
        %577 = vmatprep.subr.bf16.mxu0 0
        %578 = vmatpush1.bf16.msra.mxu0 0
        %579 = vmatprep.subr.bf16.mxu0 0
        %580 = vmatpush1.bf16.msra.mxu0 0
        %581 = vmatprep.subr.bf16.mxu0 0
        %582 = vmatpush1.bf16.msra.mxu0 0
        %583 = vmatprep.subr.bf16.mxu0 0
        %584 = vmatpush1.bf16.msra.mxu0 0
        %585 = vmatprep.subr.bf16.mxu0 0
        %586 = vmatpush1.bf16.msra.mxu0 0
        %587 = vmatprep.subr.bf16.mxu0 0
        %588 = vmatpush1.bf16.msra.mxu0 0
        %589 = vmatprep.subr.bf16.mxu0 0
        %590 = vmatpush1.bf16.msra.mxu0 0
        %591 = vmatprep.mubr.bf16.mxu0 0
        %592 = vmatmul.mubr.bf16.gmra.mrb[0].mxu0 %v557
        %v593 = vpop.f32.mrb[0].mxu0
        %v594 = vadd.f32 0.0, %v593
        %v595 = vpop.f32.mrb[0].mxu0
        %v596 = vpop.f32.mrb[0].mxu0
        %v597 = vpop.f32.mrb[0].mxu0
        %598 = vdwg.mxu0
        %599 = vst [vmem:[%s177] sm:$0xff] %v594
        %s600 = sand.u32 %s75, 1
        %s601 = scalar_lea.sflag [#allocation4], %s600
        %s602 = sand.u32 %s75, 1
        %s603 = smul.addr %s602, 8
        %s604 = scalar_lea.vmem [#allocation7], %s603
        // Predicated region
        $region37: #{tpu_custom_call.1} parent=27 // pred_check
          %p605 = pneg %p85
        $region38: #{tpu_custom_call.1} parent=27 // pred_check_branch
          %607 = sbr.rel (%p605) target = $region40
        $region39: #{tpu_custom_call.1} parent=27 // pred_region
          %s609 = ssub.s32 128, 128
          %610 = vsyncadd %s601, %s609
          %s611 = smul.addr %s20, 128
          %s612 = scalar_lea.hbm %s2, %s611
          %s614 = sshll.u32 %s604, 4
          %s615 = int_to_ptr.vmem [resolvable:$true] %s614
          %617 = dma.vmem_to_hbm [thread:$0]  %s615, 128, %s612, %s601
        $region40: #{tpu_custom_call.1} parent=27 // pred_fallthru
          _
      $region28: #{tpu_custom_call.1} parent=5 // pred_fallthru
        _
      %p618 = scmp.le.s32.totalorder 2, %s15
      // Predicated region
      $region41: #{tpu_custom_call.1} parent=5 // pred_check
        %p619 = pneg %p618
      $region42: #{tpu_custom_call.1} parent=5 // pred_check_branch
        %621 = sbr.rel (%p619) target = $region44
      $region43: #{tpu_custom_call.1} parent=5 // pred_region
        %s622 = ssub.s32 %s15, 2
        // Predicated region
        $region45: #{tpu_custom_call.1} parent=43 // pred_check
          %p623 = pneg %p91
        $region46: #{tpu_custom_call.1} parent=43 // pred_check_branch
          %625 = sbr.rel (%p623) target = $region48
        $region47: #{tpu_custom_call.1} parent=43 // pred_region
          %s626 = sand.u32 %s76, 1
          %s627 = scalar_lea.sflag [#allocation4], %s626
          %s628 = sand.u32 %s76, 1
          %s629 = smul.addr %s628, 8
          %s630 = scalar_lea.vmem [#allocation7], %s629
          %631 = dma.done %s627, 128
        $region48: #{tpu_custom_call.1} parent=43 // pred_fallthru
          _
      $region44: #{tpu_custom_call.1} parent=5 // pred_fallthru
        _
    $region6: #{tpu_custom_call.1} parent=1 // loop_footer
      %s19 = sadd.s32 1, %s15
    $region7: #{tpu_custom_call.1} parent=1 // loop_footer_branch
      %14 = sbr.rel target = $region3
    $region8: #{tpu_custom_call.1} parent=1 // loop_exit
      _
    %632 = vsyncpa [#allocation3], 1
    %s633 = scalar_lea.sflag [#allocation3], 1
    %634 = vsyncpa %s633, 1
    %635 = vsyncpa [#allocation6], 1
    %636 = vsyncpa [#allocation4], 1
    %s637 = scalar_lea.sflag [#allocation4], 1
    %638 = vsyncpa %s637, 1

</llo_original>
